<compile_context>
chip_gen: v5e
topology: v5e:2x2
jax: 0.10.0
libtpu: 0.0.40
codegen_flags: <defaults>
</compile_context>

<pallas_src>
import numpy as np
import jax
import jax.numpy as jnp
from jax.experimental import pallas as pl
from jax.experimental.pallas import tpu as pltpu

EPS = 1e-5
LANE = 128


def _bn_train(h, gamma, beta):
    # BatchNorm1d training mode: per-feature batch mean / biased variance.
    mean = jnp.mean(h, axis=0, keepdims=True)
    var = jnp.mean(jnp.square(h - mean), axis=0, keepdims=True)
    return (h - mean) * jax.lax.rsqrt(var + EPS) * gamma + beta


# --------------------------------------------------------------- main loop --
def fc1_stream_kernel(x_ref, g1_ref, be1_ref, w1_ref, part_ref):
    """Per (core-slice c, K-tile k): BN1 on the tile + partial fc1 matmul.

    The output block (1, B, H1) keeps a constant index along k, so it stays
    resident in VMEM across the reduction and acts as the f32 accumulator.
    """
    k = pl.program_id(1)

    @pl.when(k == 0)
    def _():
        part_ref[...] = jnp.zeros_like(part_ref)

    # BN1 on this K-tile (batch statistics are per-feature -> tile-local).
    x = x_ref[...]
    mean = jnp.mean(x, axis=0, keepdims=True)
    var = jnp.mean(jnp.square(x - mean), axis=0, keepdims=True)
    h = (x - mean) * jax.lax.rsqrt(var + EPS) * g1_ref[...] + be1_ref[...]

    # Streamed fc1 partial product: bf16 MXU operands, f32 accumulation.
    part_ref[...] += jnp.dot(h.astype(w1_ref.dtype), w1_ref[...],
                             preferred_element_type=jnp.float32)[None]


# ---------------------------------------------------------------- epilogue --
def epilogue_kernel(part_ref, b1_ref, g2_ref, be2_ref, w2_ref, b2_ref,
                    g3_ref, be3_ref, w3t_ref, b3_ref, o_ref):
    # Combine per-core partials, then bias + ReLU + BN2 + fc2 + ReLU + BN3 + fc3.
    h = jnp.sum(part_ref[...], axis=0) + b1_ref[...]
    h = jnp.maximum(h, 0.0)
    h = _bn_train(h, g2_ref[...], be2_ref[...])
    h = jnp.dot(h.astype(w2_ref.dtype), w2_ref[...],
                preferred_element_type=jnp.float32) + b2_ref[...]
    h = jnp.maximum(h, 0.0)
    h = _bn_train(h, g3_ref[...], be3_ref[...])
    # fc3 has N=1: VPU multiply + lane reduction (keeps the MXU out of it).
    o_ref[...] = jnp.sum(h * w3t_ref[...], axis=-1, keepdims=True) + b3_ref[...]


# ------------------------------------------------------------------ config --
def auto_config(d_in, device_kind=None):
    """Generation-gated tiling / buffering config for the fc1 streaming loop."""
    if device_kind is None:
        try:
            device_kind = jax.devices()[0].device_kind
        except Exception:
            device_kind = ""
    kind = str(device_kind).lower()
    if "v7" in kind:
        # 64 MiB VMEM, 2 TensorCores: modest tiles, split K across both cores.
        tk, nc, vmem, bufs = 1024, 2, 48 * 1024 * 1024, 2
    elif "v6" in kind or "v5" in kind:
        # 128 MiB VMEM, 1 TC: big streamed tiles + 3-deep streaming buffers.
        tk, nc, vmem, bufs = 2048, 1, 100 * 1024 * 1024, 3
    else:
        tk, nc, vmem, bufs = 1024, 1, 64 * 1024 * 1024, 2

    # Clamp the K-tile to what the (lane-aligned, per-core) reduction needs.
    per_core_k = pl.cdiv(d_in, nc * LANE) * LANE
    tk = max(LANE, min(tk, per_core_k))
    d_pad = pl.cdiv(d_in, nc * tk) * nc * tk
    kt = d_pad // (nc * tk)
    stream_bufs = bufs if (bufs > 2 and kt >= bufs) else None
    return dict(tk=tk, nc=nc, kt=kt, d_pad=d_pad,
                vmem_limit_bytes=vmem, stream_bufs=stream_bufs)


# ---------------------------------------------------- one-time weight prep --
def prepare_params(params, img_hwc, n_scalar, cfg):
    """One-time weight preparation (do NOT run per forward):
      * fold the torch NHWC->NCHW permute into a row permutation of
        w1 / gamma1 / beta1 (so x can be passed as a plain NHWC row-major
        flatten with zero data movement),
      * zero-pad the fc1 reduction dim to cfg['d_pad'] (gamma=1 / beta=0 /
        zero w1 rows, so padded columns contribute exactly 0),
      * cast the two big matmul weights to bf16, pre-transpose w3.
    """
    H, W, C = img_hwc
    d_img = H * W * C
    d_in = d_img + n_scalar
    pad = cfg["d_pad"] - d_in

    # NHWC flat index i=(h*W+w)*C+c  ->  NCHW flat index j=(c*H+h)*W+w.
    nchw_idx = np.arange(d_img).reshape(C, H, W)
    perm = np.concatenate([np.transpose(nchw_idx, (1, 2, 0)).reshape(-1),
                           d_img + np.arange(n_scalar)])

    # TODO(synk): optionally quantize w1 to int8 (v5e/v6e) or fp8 e4m3 (v7x)
    # with per-output-column scales folded into the epilogue to halve the
    # dominant HBM stream.
    w1 = jnp.pad(params["w1"][perm], ((0, pad), (0, 0))).astype(jnp.bfloat16)
    g1 = jnp.pad(params["g1"][:, perm], ((0, 0), (0, pad)), constant_values=1.0)
    be1 = jnp.pad(params["be1"][:, perm], ((0, 0), (0, pad)))

    return {
        "w1": w1, "g1": g1, "be1": be1, "b1": params["b1"],
        "g2": params["g2"], "be2": params["be2"],
        "w2": params["w2"].astype(jnp.bfloat16), "b2": params["b2"],
        "g3": params["g3"], "be3": params["be3"],
        "w3t": jnp.transpose(params["w3"]), "b3": params["b3"],
    }


# ----------------------------------------------------------------- forward --
def critic_forward(x, scalar, prep, cfg):
    """x: (B, H, W, C) NHWC; scalar: (B, S). Returns (B, 1) f32.

    Note: the whole batch stays in a single block (BatchNorm batch statistics
    require it); keeping B a multiple of 8 avoids wasted sublanes but B must
    not be zero-padded (that would change the batch statistics).
    """
    B = x.shape[0]
    tk, nc, kt, d_pad = cfg["tk"], cfg["nc"], cfg["kt"], cfg["d_pad"]
    h1 = prep["w1"].shape[1]
    d_out = prep["w3t"].shape[0]
    assert d_out == 1, "fc3 lane-reduce path assumes a single output"

    # NHWC row-major flatten (no data movement; the torch permute is folded
    # into the prepared w1 row order) + scalar concat + zero K-pad.
    xf = x.reshape(B, -1).astype(jnp.float32)
    pieces = [xf, scalar.astype(jnp.float32)]
    pad = d_pad - (xf.shape[1] + scalar.shape[1])
    if pad:
        pieces.append(jnp.zeros((B, pad), jnp.float32))
    xcat = jnp.concatenate(pieces, axis=1)

    bufs = cfg["stream_bufs"]

    def stream_spec(shape, imap):
        if bufs is None:
            return pl.BlockSpec(shape, imap)
        return pl.BlockSpec(shape, imap, pipeline_mode=pl.Buffered(bufs))

    kmap = lambda c, k: (0, c * kt + k)
    in_specs = [
        stream_spec((B, tk), kmap),                           # x       K-tile
        stream_spec((1, tk), kmap),                           # gamma1  K-tile
        stream_spec((1, tk), kmap),                           # beta1   K-tile
        stream_spec((tk, h1), lambda c, k: (c * kt + k, 0)),  # w1 bf16 K-tile
    ]

    # Main loop: per-core-slice (B, H1) f32 partials of BN1 -> fc1.
    partials = pl.pallas_call(
        fc1_stream_kernel,
        out_shape=jax.ShapeDtypeStruct((nc, B, h1), jnp.float32),
        grid_spec=pltpu.PrefetchScalarGridSpec(
            num_scalar_prefetch=0,
            grid=(nc, kt),
            in_specs=in_specs,
            out_specs=pl.BlockSpec((1, B, h1), lambda c, k: (c, 0, 0)),
        ),
        compiler_params=pltpu.CompilerParams(
            dimension_semantics=("parallel", "arbitrary"),
            vmem_limit_bytes=cfg["vmem_limit_bytes"],
        ),
    )(xcat, prep["g1"], prep["be1"], prep["w1"])

    # Tiny epilogue (single invocation, whole arrays in VMEM): combine the
    # per-core partials + bias/ReLU/BN2/fc2/ReLU/BN3/fc3.
    out = pl.pallas_call(
        epilogue_kernel,
        out_shape=jax.ShapeDtypeStruct((B, d_out), jnp.float32),
        compiler_params=pltpu.CompilerParams(
            vmem_limit_bytes=32 * 1024 * 1024),
    )(partials, prep["b1"], prep["g2"], prep["be2"], prep["w2"], prep["b2"],
      prep["g3"], prep["be3"], prep["w3t"], prep["b3"])
    return out


# --------------------------------------------------------------- reference --
def critic_reference(x, scalar, params, mxu_dtype=jnp.bfloat16):
    """Pure-JAX reference in the original (torch) layout.

    mxu_dtype=jnp.bfloat16 mirrors the kernel's MXU numerics; pass float32 to
    compare against the full-precision PyTorch baseline (looser tolerance).
    """
    B = x.shape[0]
    xf = jnp.transpose(x.astype(jnp.float32), (0, 3, 1, 2)).reshape(B, -1)
    h = jnp.concatenate([xf, scalar.astype(jnp.float32)], axis=1)
    h = _bn_train(h, params["g1"], params["be1"])
    h = jnp.dot(h.astype(mxu_dtype), params["w1"].astype(mxu_dtype),
                preferred_element_type=jnp.float32) + params["b1"]
    h = jnp.maximum(h, 0.0)
    h = _bn_train(h, params["g2"], params["be2"])
    h = jnp.dot(h.astype(mxu_dtype), params["w2"].astype(mxu_dtype),
                preferred_element_type=jnp.float32) + params["b2"]
    h = jnp.maximum(h, 0.0)
    h = _bn_train(h, params["g3"], params["be3"])
    return jnp.dot(h, params["w3"],
                   preferred_element_type=jnp.float32) + params["b3"]


def init_params(key, d_in, h1, h2, d_out):
    ks = jax.random.split(key, 6)
    p = {}
    # fc weights stored already-transposed as (in, out); PyTorch Linear is x @ W^T + b.
    p["w1"] = jax.random.normal(ks[0], (d_in, h1), jnp.float32) * 0.02
    p["b1"] = jax.random.normal(ks[1], (1, h1), jnp.float32) * 0.02
    p["w2"] = jax.random.normal(ks[2], (h1, h2), jnp.float32) * 0.02
    p["b2"] = jax.random.normal(ks[3], (1, h2), jnp.float32) * 0.02
    p["w3"] = jax.random.normal(ks[4], (h2, d_out), jnp.float32) * 0.02
    p["b3"] = jax.random.normal(ks[5], (1, d_out), jnp.float32) * 0.02
    # BatchNorm affine params: PyTorch default init (weight=1, bias=0).
    p["g1"] = jnp.ones((1, d_in), jnp.float32)
    p["be1"] = jnp.zeros((1, d_in), jnp.float32)
    p["g2"] = jnp.ones((1, h1), jnp.float32)
    p["be2"] = jnp.zeros((1, h1), jnp.float32)
    p["g3"] = jnp.ones((1, h2), jnp.float32)
    p["be3"] = jnp.zeros((1, h2), jnp.float32)
    return p


if __name__ == "__main__":
    # Scaled-down shapes consistent with the module structure:
    # original: H=72, W=96, C=4, scalar=4, fc 4096 -> 1024 -> 1
    # scaled  : H=8,  W=12, C=4, scalar=4, fc  256 ->  128 -> 1
    B, H, W, C, S = 2, 8, 12, 4, 4
    D_IN = H * W * C + S
    H1, H2, D_OUT = 256, 128, 1

    key = jax.random.PRNGKey(0)
    kx, ks, kp = jax.random.split(key, 3)
    x = jax.random.normal(kx, (B, H, W, C), jnp.float32)
    scalar = jax.random.normal(ks, (B, S), jnp.float32)
    params = init_params(kp, D_IN, H1, H2, D_OUT)

    cfg = auto_config(D_IN)                              # gen-gated tiling
    prep = prepare_params(params, (H, W, C), S, cfg)     # one-time weight prep

    out = jax.block_until_ready(critic_forward(x, scalar, prep, cfg))
    ref_bf16 = jax.block_until_ready(critic_reference(x, scalar, params))
    ref_f32 = jax.block_until_ready(
        critic_reference(x, scalar, params, mxu_dtype=jnp.float32))

    assert out.shape == (B, D_OUT), out.shape
    assert jnp.allclose(out, ref_bf16, atol=5e-3, rtol=5e-3), (out, ref_bf16)
    assert jnp.allclose(out, ref_f32, atol=3e-2, rtol=3e-2), (out, ref_f32)
    print("KERNEL_OK")
</pallas_src>

<mosaic_0001>
module attributes {stable_mosaic.version = 11 : i64} {
  func.func @fc1_stream_kernel(%arg0: i32, %arg1: i32, %arg2: memref<2x512xf32, #tpu.memory_space<vmem>>, %arg3: memref<1x512xf32, #tpu.memory_space<vmem>>, %arg4: memref<1x512xf32, #tpu.memory_space<vmem>>, %arg5: memref<512x256xbf16, #tpu.memory_space<vmem>>, %arg6: memref<1x2x256xf32, #tpu.memory_space<vmem>>) attributes {dimension_semantics = [#tpu.dimension_semantics<parallel>, #tpu.dimension_semantics<arbitrary>], iteration_bounds = array<i64: 1, 1>, scalar_prefetch = 0 : i64, scratch_operands = 0 : i64, tpu.core_type = #tpu.core_type<tc>, window_params = [{transform_indices = @transform_0, window_bounds = array<i64: 2, 512>}, {transform_indices = @transform_1, window_bounds = array<i64: 1, 512>}, {transform_indices = @transform_2, window_bounds = array<i64: 1, 512>}, {transform_indices = @transform_3, window_bounds = array<i64: 512, 256>}, {transform_indices = @transform_4, window_bounds = array<i64: 1, 2, 256>}]} {
    %c0_i32 = arith.constant 0 : i32
    %0 = arith.cmpi eq, %arg1, %c0_i32 : i32
    %1 = arith.extui %0 : i1 to i32
    %c0_i32_0 = arith.constant 0 : i32
    %2 = arith.cmpi ne, %1, %c0_i32_0 : i32
    scf.if %2 {
      %cst_19 = arith.constant 0.000000e+00 : f32
      %35 = vector.broadcast %cst_19 : f32 to vector<1x2x256xf32>
      %c0_20 = arith.constant 0 : index
      %c0_21 = arith.constant 0 : index
      %c0_22 = arith.constant 0 : index
      %36 = vector.load %arg6[%c0_20, %c0_21, %c0_22] : memref<1x2x256xf32, #tpu.memory_space<vmem>>, vector<1x2x256xf32>
      tpu.vector_store %arg6[%c0_20, %c0_21, %c0_22], %35 {strides = array<i32>} : memref<1x2x256xf32, #tpu.memory_space<vmem>>, vector<1x2x256xf32>,
    } else {
    }
    %c0 = arith.constant 0 : index
    %c0_1 = arith.constant 0 : index
    %3 = vector.load %arg2[%c0, %c0_1] : memref<2x512xf32, #tpu.memory_space<vmem>>, vector<2x512xf32>
    %cst = arith.constant dense<0.000000e+00> : vector<512xf32>
    %4 = vector.multi_reduction <add>, %3, %cst [0] : vector<2x512xf32> to vector<512xf32>
    %5 = vector.shape_cast %4 : vector<512xf32> to vector<1x512xf32>
    %cst_2 = arith.constant 2.000000e+00 : f32
    %6 = vector.broadcast %cst_2 : f32 to vector<1x512xf32>
    %7 = arith.divf %5, %6 : vector<1x512xf32>
    %8 = vector.broadcast %7 : vector<1x512xf32> to vector<2x512xf32>
    %9 = arith.subf %3, %8 : vector<2x512xf32>
    %10 = arith.mulf %9, %9 : vector<2x512xf32>
    %cst_3 = arith.constant dense<0.000000e+00> : vector<512xf32>
    %11 = vector.multi_reduction <add>, %10, %cst_3 [0] : vector<2x512xf32> to vector<512xf32>
    %12 = vector.shape_cast %11 : vector<512xf32> to vector<1x512xf32>
    %cst_4 = arith.constant 2.000000e+00 : f32
    %13 = vector.broadcast %cst_4 : f32 to vector<1x512xf32>
    %14 = arith.divf %12, %13 : vector<1x512xf32>
    %15 = vector.broadcast %7 : vector<1x512xf32> to vector<2x512xf32>
    %16 = arith.subf %3, %15 : vector<2x512xf32>
    %cst_5 = arith.constant 9.99999974E-6 : f32
    %17 = vector.broadcast %cst_5 : f32 to vector<1x512xf32>
    %18 = arith.addf %14, %17 : vector<1x512xf32>
    %19 = math.rsqrt %18 : vector<1x512xf32>
    %20 = vector.broadcast %19 : vector<1x512xf32> to vector<2x512xf32>
    %21 = arith.mulf %16, %20 : vector<2x512xf32>
    %c0_6 = arith.constant 0 : index
    %c0_7 = arith.constant 0 : index
    %22 = vector.load %arg3[%c0_6, %c0_7] : memref<1x512xf32, #tpu.memory_space<vmem>>, vector<1x512xf32>
    %23 = vector.broadcast %22 : vector<1x512xf32> to vector<2x512xf32>
    %24 = arith.mulf %21, %23 : vector<2x512xf32>
    %c0_8 = arith.constant 0 : index
    %c0_9 = arith.constant 0 : index
    %25 = vector.load %arg4[%c0_8, %c0_9] : memref<1x512xf32, #tpu.memory_space<vmem>>, vector<1x512xf32>
    %26 = vector.broadcast %25 : vector<1x512xf32> to vector<2x512xf32>
    %27 = arith.addf %24, %26 : vector<2x512xf32>
    %c0_10 = arith.constant 0 : index
    %c0_11 = arith.constant 0 : index
    %c0_12 = arith.constant 0 : index
    %28 = vector.load %arg6[%c0_10, %c0_11, %c0_12] : memref<1x2x256xf32, #tpu.memory_space<vmem>>, vector<1x2x256xf32>
    %29 = arith.truncf %27 : vector<2x512xf32> to vector<2x512xbf16>
    %c0_13 = arith.constant 0 : index
    %c0_14 = arith.constant 0 : index
    %30 = vector.load %arg5[%c0_13, %c0_14] : memref<512x256xbf16, #tpu.memory_space<vmem>>, vector<512x256xbf16>
    %cst_15 = arith.constant dense<0.000000e+00> : vector<2x256xf32>
    %31 = tpu.matmul %29, %30, %cst_15 {dimension_numbers = #tpu.dot_dimension_numbers<[1], [0], [0], [1], [0, 0, 1, 1], [], []>} : vector<2x512xbf16>, vector<512x256xbf16>, vector<2x256xf32> -> vector<2x256xf32>
    %32 = vector.shape_cast %31 : vector<2x256xf32> to vector<1x2x256xf32>
    %33 = arith.addf %28, %32 : vector<1x2x256xf32>
    %c0_16 = arith.constant 0 : index
    %c0_17 = arith.constant 0 : index
    %c0_18 = arith.constant 0 : index
    %34 = vector.load %arg6[%c0_16, %c0_17, %c0_18] : memref<1x2x256xf32, #tpu.memory_space<vmem>>, vector<1x2x256xf32>
    tpu.vector_store %arg6[%c0_16, %c0_17, %c0_18], %33 {strides = array<i32>} : memref<1x2x256xf32, #tpu.memory_space<vmem>>, vector<1x2x256xf32>,
    return
  }
  func.func @transform_0(%arg0: i32, %arg1: i32) -> (i32, i32) {
    %c1_i32 = arith.constant 1 : i32
    %0 = arith.muli %arg0, %c1_i32 : i32
    %1 = arith.addi %0, %arg1 : i32
    %c0_i32 = arith.constant 0 : i32
    %c0_i32_0 = arith.constant 0 : i32
    return %c0_i32, %1 : i32, i32
  }
  func.func @transform_1(%arg0: i32, %arg1: i32) -> (i32, i32) {
    %c1_i32 = arith.constant 1 : i32
    %0 = arith.muli %arg0, %c1_i32 : i32
    %1 = arith.addi %0, %arg1 : i32
    %c0_i32 = arith.constant 0 : i32
    %c0_i32_0 = arith.constant 0 : i32
    return %c0_i32, %1 : i32, i32
  }
  func.func @transform_2(%arg0: i32, %arg1: i32) -> (i32, i32) {
    %c1_i32 = arith.constant 1 : i32
    %0 = arith.muli %arg0, %c1_i32 : i32
    %1 = arith.addi %0, %arg1 : i32
    %c0_i32 = arith.constant 0 : i32
    %c0_i32_0 = arith.constant 0 : i32
    return %c0_i32, %1 : i32, i32
  }
  func.func @transform_3(%arg0: i32, %arg1: i32) -> (i32, i32) {
    %c1_i32 = arith.constant 1 : i32
    %0 = arith.muli %arg0, %c1_i32 : i32
    %1 = arith.addi %0, %arg1 : i32
    %c0_i32 = arith.constant 0 : i32
    %c0_i32_0 = arith.constant 0 : i32
    return %1, %c0_i32 : i32, i32
  }
  func.func @transform_4(%arg0: i32, %arg1: i32) -> (i32, i32, i32) {
    %c0_i32 = arith.constant 0 : i32
    %c0_i32_0 = arith.constant 0 : i32
    %c0_i32_1 = arith.constant 0 : i32
    return %arg0, %c0_i32, %c0_i32_0 : i32, i32, i32
  }
}

</mosaic_0001>

<llo_original>
// kernel: tpu_custom_call.1
$region0: #{tpu_custom_call.1}
  #allocation0 [shape = 'u32[]', space=smem, size = 0x4, offset = 0x4, fixed_abs, tag = 'smem constant byte address 0x4 - core index']
  #allocation1 [shape = 'u32[72,128]{1,0:T(1,128)}', space=vmem, size = 0x9000, scoped, tag = 'internal scratch']
  %s0 = inlined_call_operand.hbm [shape: f32[2,512], index: 0, kind: input, shape index: {}]
  %s1 = inlined_call_operand.hbm [shape: f32[1,512], index: 1, kind: input, shape index: {}]
  %s2 = inlined_call_operand.hbm [shape: f32[1,512], index: 2, kind: input, shape index: {}]
  %s3 = inlined_call_operand.hbm [shape: bf16[512,256], index: 3, kind: input, shape index: {}]
  %s4 = inlined_call_operand.hbm [shape: f32[1,2,256], index: 4, kind: output, shape index: {}]
  %s5 = sld [smem:[#allocation0]]
  $region46: #{tpu_custom_call.1} parent=0
    _
  %s7 = ssub.s32 1, %s5
  %s8 = scalar_select 0, %s7, %s5
  $region1: #{tpu_custom_call.1} parent=0
    #allocation2 [shape = 'u8[4096]{0}', space=vmem, size = 0x1000, scoped, tag = 'input window, operand 0, single buffered']
    #allocation3 [shape = 's32[1]{0}', space=sflag, size = 0x4, scoped, tag = 'scoped memory for tpu_custom_call.1']
    #allocation4 [shape = 's32[1]{0}', space=sflag, size = 0x4, scoped, tag = 'scoped memory for tpu_custom_call.1']
    #allocation5 [shape = 'u8[2048]{0}', space=vmem, size = 0x800, scoped, tag = 'input window, operand 1, single buffered']
    #allocation6 [shape = 's32[1]{0}', space=sflag, size = 0x4, scoped, tag = 'scoped memory for tpu_custom_call.1']
    #allocation7 [shape = 'u8[2048]{0}', space=vmem, size = 0x800, scoped, tag = 'input window, operand 2, single buffered']
    #allocation8 [shape = 'u8[262144]{0}', space=vmem, size = 0x40000, scoped, tag = 'input window, operand 3, single buffered']
    #allocation9 [shape = 's32[1]{0}', space=sflag, size = 0x4, scoped, tag = 'scoped memory for tpu_custom_call.1']
    #allocation10 [shape = 'u8[2048]{0}', space=vmem, size = 0x800, scoped, tag = 'output window, operand 0, single buffered']
    %9 = vsyncpa [#allocation3], 0
    %10 = vsyncpa [#allocation6], 0
    %11 = vsyncpa [#allocation9], 0
    %12 = vsyncpa [#allocation4], 0
    // Predicated region
    $region2: #{tpu_custom_call.1} parent=1 // pred_check
      _
    $region3: #{tpu_custom_call.1} parent=1 // pred_check_branch
      %14 = sbr.rel (0) target = $region5
    $region4: #{tpu_custom_call.1} parent=1 // pred_region
      %s15 = sadd.s32 0, 0
      %s16 = smul.u32 4, %s15
      %18 = vsyncadd [#allocation3], 0
      %s19 = smul.addr %s16, 2
      %s20 = scalar_lea.hbm %s0, %s19
      %s22 = sshll.u32 %s20, 4
      %s23 = int_to_ptr.hbm [resolvable:$true] %s22
      %s24 = sshll.u32 [#allocation2], 4
      %s25 = int_to_ptr.vmem [resolvable:$true] %s24
      %27 = dma.hbm_to_vmem [thread:$0]  %s23, 128, %s25, [#allocation3]
    $region5: #{tpu_custom_call.1} parent=1 // pred_fallthru
      _
    // Predicated region
    $region6: #{tpu_custom_call.1} parent=1 // pred_check
      _
    $region7: #{tpu_custom_call.1} parent=1 // pred_check_branch
      %29 = sbr.rel (0) target = $region9
    $region8: #{tpu_custom_call.1} parent=1 // pred_region
      %s30 = sadd.s32 0, 0
      %s31 = smul.u32 4, %s30
      %33 = vsyncadd [#allocation6], 0
      %s34 = scalar_lea.hbm %s1, %s31
      %s36 = sshll.u32 %s34, 4
      %s37 = int_to_ptr.hbm [resolvable:$true] %s36
      %s38 = sshll.u32 [#allocation5], 4
      %s39 = int_to_ptr.vmem [resolvable:$true] %s38
      %41 = dma.hbm_to_vmem [thread:$0]  %s37, 64, %s39, [#allocation6]
    $region9: #{tpu_custom_call.1} parent=1 // pred_fallthru
      _
    // Predicated region
    $region10: #{tpu_custom_call.1} parent=1 // pred_check
      _
    $region11: #{tpu_custom_call.1} parent=1 // pred_check_branch
      %43 = sbr.rel (0) target = $region13
    $region12: #{tpu_custom_call.1} parent=1 // pred_region
      %s44 = sadd.s32 0, 0
      %s45 = smul.u32 4, %s44
      %47 = vsyncadd [#allocation6], 0
      %s48 = scalar_lea.hbm %s2, %s45
      %s50 = sshll.u32 %s48, 4
      %s51 = int_to_ptr.hbm [resolvable:$true] %s50
      %s52 = sshll.u32 [#allocation7], 4
      %s53 = int_to_ptr.vmem [resolvable:$true] %s52
      %55 = dma.hbm_to_vmem [thread:$0]  %s51, 64, %s53, [#allocation6]
    $region13: #{tpu_custom_call.1} parent=1 // pred_fallthru
      _
    // Predicated region
    $region14: #{tpu_custom_call.1} parent=1 // pred_check
      _
    $region15: #{tpu_custom_call.1} parent=1 // pred_check_branch
      %57 = sbr.rel (0) target = $region17
    $region16: #{tpu_custom_call.1} parent=1 // pred_region
      %s58 = sadd.s32 0, 0
      %s59 = smul.u32 64, %s58
      %61 = vsyncadd [#allocation9], 0
      %s62 = smul.addr %s59, 2
      %s63 = smul.addr %s62, 4
      %s64 = scalar_lea.hbm %s3, %s63
      %s65 = sshll.u32 %s64, 4
      %s66 = int_to_ptr.hbm [resolvable:$true] %s65
      %s67 = sshll.u32 [#allocation8], 4
      %s68 = int_to_ptr.vmem [resolvable:$true] %s67
      %73 = dma.hbm_to_vmem [thread:$0]  %s66, 8192, %s68, [#allocation9], 128, 128, 8
    $region17: #{tpu_custom_call.1} parent=1 // pred_fallthru
      _
    // Predicated region
    $region18: #{tpu_custom_call.1} parent=1 // pred_check
      _
    $region19: #{tpu_custom_call.1} parent=1 // pred_check_branch
      %75 = sbr.rel (0) target = $region21
    $region20: #{tpu_custom_call.1} parent=1 // pred_region
      %77 = dma.done [#allocation3], 128
    $region21: #{tpu_custom_call.1} parent=1 // pred_fallthru
      _
    // Predicated region
    $region22: #{tpu_custom_call.1} parent=1 // pred_check
      _
    $region23: #{tpu_custom_call.1} parent=1 // pred_check_branch
      %79 = sbr.rel (0) target = $region25
    $region24: #{tpu_custom_call.1} parent=1 // pred_region
      %81 = dma.done [#allocation6], 64
    $region25: #{tpu_custom_call.1} parent=1 // pred_fallthru
      _
    // Predicated region
    $region26: #{tpu_custom_call.1} parent=1 // pred_check
      _
    $region27: #{tpu_custom_call.1} parent=1 // pred_check_branch
      %83 = sbr.rel (0) target = $region29
    $region28: #{tpu_custom_call.1} parent=1 // pred_region
      %85 = dma.done [#allocation6], 64
    $region29: #{tpu_custom_call.1} parent=1 // pred_fallthru
      _
    // Predicated region
    $region30: #{tpu_custom_call.1} parent=1 // pred_check
      _
    $region31: #{tpu_custom_call.1} parent=1 // pred_check_branch
      %87 = sbr.rel (0) target = $region33
    $region32: #{tpu_custom_call.1} parent=1 // pred_region
      %89 = dma.done [#allocation9], 8192
    $region33: #{tpu_custom_call.1} parent=1 // pred_fallthru
      _
    %s90 = sadd.s32 0, 0
    %s91 = smul.u32 4, %s90
    %s92 = sadd.s32 0, 0
    %s93 = smul.u32 4, %s92
    %s94 = sadd.s32 0, 0
    %s95 = smul.u32 4, %s94
    %s96 = sadd.s32 0, 0
    %s97 = smul.u32 64, %s96
    %p98 = scmp.eq.s32.totalorder 0, 0
    // Predicated region
    $region34: #{tpu_custom_call.1} parent=1 // pred_check
      %p99 = pneg %p98
    $region35: #{tpu_custom_call.1} parent=1 // pred_check_branch
      %101 = sbr.rel (%p99) target = $region37
    $region36: #{tpu_custom_call.1} parent=1 // pred_region
      %102 = vst [vmem:[#allocation10] sm:$0xf] 0.0
    $region37: #{tpu_custom_call.1} parent=1 // pred_fallthru
      _
    %v103 = vld [vmem:[#allocation2] sm:$0xff]
    %105 = vst [vmem:[#allocation1] ss:$4 sm:$0xff] %v103
    %v106 = vld.sshfl [vmem:[#allocation1] sm:$0xff pattern:$0x73625140]
    %v107 = vld.sshfl [vmem:[#allocation1 + $0x8] sm:$0xff pattern:$0x73625140]
    %v108 = vld.sshfl [vmem:[#allocation1 + $0x10] sm:$0xff pattern:$0x73625140]
    %v109 = vld.sshfl [vmem:[#allocation1 + $0x18] sm:$0xff pattern:$0x73625140]
    %vm114 = vcmask 1041408
    %v115 = vsel %vm114, %v106, 0.0
    %v116 = vrot.slane %v115, 4
    %v117 = vadd.f32 %v115, %v116
    %v118 = vrot.slane %v117, 2
    %v119 = vadd.f32 %v117, %v118
    %v120 = vrot.slane %v119, 1
    %v121 = vadd.f32 %v119, %v120
    %v122 = vsel %vm114, %v107, 0.0
    %v123 = vrot.slane %v122, 4
    %v124 = vadd.f32 %v122, %v123
    %v125 = vrot.slane %v124, 2
    %v126 = vadd.f32 %v124, %v125
    %v127 = vrot.slane %v126, 1
    %v128 = vadd.f32 %v126, %v127
    %v129 = vsel %vm114, %v108, 0.0
    %v130 = vrot.slane %v129, 4
    %v131 = vadd.f32 %v129, %v130
    %v132 = vrot.slane %v131, 2
    %v133 = vadd.f32 %v131, %v132
    %v134 = vrot.slane %v133, 1
    %v135 = vadd.f32 %v133, %v134
    %v136 = vsel %vm114, %v109, 0.0
    %v137 = vrot.slane %v136, 4
    %v138 = vadd.f32 %v136, %v137
    %v139 = vrot.slane %v138, 2
    %v140 = vadd.f32 %v138, %v139
    %v141 = vrot.slane %v140, 1
    %v142 = vadd.f32 %v140, %v141
    %v143 = vrcp.pop 2.0
    %v144 = vmul.f32 2.0, %v143
    %v145 = vsub.f32 1.0, %v144
    %v146 = vmul.f32 %v143, %v145
    %v147 = vadd.f32 %v143, %v146
    %vm148 = vweird.f32 %v143
    %v149 = vsel %vm148, %v143, %v147
    %v150 = vmul.f32 %v121, %v149
    %v151 = vmul.f32 %v128, %v149
    %v152 = vmul.f32 %v135, %v149
    %v153 = vmul.f32 %v142, %v149
    %v158 = vrot.slane %v151, 6
    %v159 = vrot.slane %v152, 4
    %v160 = vrot.slane %v153, 2
    %v161 = vsel %vm114, %v150, %v158
    %vm162 = vcmask 1045508
    %v163 = vsel %vm162, %v159, %v160
    %vm164 = vcmask 1043456
    %v165 = vsel %vm164, %v161, %v163
    %v167 = vsub.f32 %v103, %v165
    %v168 = vmul.f32 %v167, %v167
    %170 = vst [vmem:[#allocation1] ss:$4 sm:$0xff] %v168
    %v171 = vld.sshfl [vmem:[#allocation1] sm:$0xff pattern:$0x73625140]
    %v172 = vld.sshfl [vmem:[#allocation1 + $0x8] sm:$0xff pattern:$0x73625140]
    %v173 = vld.sshfl [vmem:[#allocation1 + $0x10] sm:$0xff pattern:$0x73625140]
    %v174 = vld.sshfl [vmem:[#allocation1 + $0x18] sm:$0xff pattern:$0x73625140]
    %v179 = vsel %vm114, %v171, 0.0
    %v180 = vrot.slane %v179, 4
    %v181 = vadd.f32 %v179, %v180
    %v182 = vrot.slane %v181, 2
    %v183 = vadd.f32 %v181, %v182
    %v184 = vrot.slane %v183, 1
    %v185 = vadd.f32 %v183, %v184
    %v186 = vsel %vm114, %v172, 0.0
    %v187 = vrot.slane %v186, 4
    %v188 = vadd.f32 %v186, %v187
    %v189 = vrot.slane %v188, 2
    %v190 = vadd.f32 %v188, %v189
    %v191 = vrot.slane %v190, 1
    %v192 = vadd.f32 %v190, %v191
    %v193 = vsel %vm114, %v173, 0.0
    %v194 = vrot.slane %v193, 4
    %v195 = vadd.f32 %v193, %v194
    %v196 = vrot.slane %v195, 2
    %v197 = vadd.f32 %v195, %v196
    %v198 = vrot.slane %v197, 1
    %v199 = vadd.f32 %v197, %v198
    %v200 = vsel %vm114, %v174, 0.0
    %v201 = vrot.slane %v200, 4
    %v202 = vadd.f32 %v200, %v201
    %v203 = vrot.slane %v202, 2
    %v204 = vadd.f32 %v202, %v203
    %v205 = vrot.slane %v204, 1
    %v206 = vadd.f32 %v204, %v205
    %v207 = vmul.f32 %v185, %v149
    %v208 = vmul.f32 %v192, %v149
    %v209 = vmul.f32 %v199, %v149
    %v210 = vmul.f32 %v206, %v149
    %v211 = vadd.f32 %v207, 1e-05
    %v212 = vadd.f32 %v208, 1e-05
    %v213 = vadd.f32 %v209, 1e-05
    %v214 = vadd.f32 %v210, 1e-05
    %v215 = vrsqrt.pop %v211
    %v216 = vmul.f32 %v215, %v211
    %v217 = vmul.f32 %v216, %v215
    %v218 = vmul.f32 0.5, %v217
    %v219 = vsub.f32 1.5, %v218
    %v220 = vmul.f32 %v215, %v219
    %vm221 = vweird.f32 %v211
    %vm222 = vweird.f32 %v215
    %vm223 = vmor %vm221, %vm222
    %v224 = vsel %vm223, %v215, %v220
    %v225 = vrsqrt.pop %v212
    %v226 = vmul.f32 %v225, %v212
    %v227 = vmul.f32 %v226, %v225
    %v228 = vmul.f32 0.5, %v227
    %v229 = vsub.f32 1.5, %v228
    %v230 = vmul.f32 %v225, %v229
    %vm231 = vweird.f32 %v212
    %vm232 = vweird.f32 %v225
    %vm233 = vmor %vm231, %vm232
    %v234 = vsel %vm233, %v225, %v230
    %v235 = vrsqrt.pop %v213
    %v236 = vmul.f32 %v235, %v213
    %v237 = vmul.f32 %v236, %v235
    %v238 = vmul.f32 0.5, %v237
    %v239 = vsub.f32 1.5, %v238
    %v240 = vmul.f32 %v235, %v239
    %vm241 = vweird.f32 %v213
    %vm242 = vweird.f32 %v235
    %vm243 = vmor %vm241, %vm242
    %v244 = vsel %vm243, %v235, %v240
    %v245 = vrsqrt.pop %v214
    %v246 = vmul.f32 %v245, %v214
    %v247 = vmul.f32 %v246, %v245
    %v248 = vmul.f32 0.5, %v247
    %v249 = vsub.f32 1.5, %v248
    %v250 = vmul.f32 %v245, %v249
    %vm251 = vweird.f32 %v214
    %vm252 = vweird.f32 %v245
    %vm253 = vmor %vm251, %vm252
    %v254 = vsel %vm253, %v245, %v250
    %v259 = vrot.slane %v234, 6
    %v260 = vrot.slane %v244, 4
    %v261 = vrot.slane %v254, 2
    %v262 = vsel %vm114, %v224, %v259
    %v263 = vsel %vm162, %v260, %v261
    %v264 = vsel %vm164, %v262, %v263
    %v266 = vmul.f32 %v167, %v264
    %v267 = vld [vmem:[#allocation5] sm:$0xf]
    %v269 = vperm.slane %v267, 0
    %v270 = vperm.slane %v267, 1
    %v271 = vperm.slane %v267, 2
    %v272 = vperm.slane %v267, 3
    %v273 = vrot.slane %v270, 6
    %v274 = vrot.slane %v271, 4
    %v275 = vrot.slane %v272, 2
    %v276 = vsel %vm114, %v269, %v273
    %v277 = vsel %vm162, %v274, %v275
    %v278 = vsel %vm164, %v276, %v277
    %v280 = vmul.f32 %v266, %v278
    %v281 = vld [vmem:[#allocation7] sm:$0xf]
    %v283 = vperm.slane %v281, 0
    %v284 = vperm.slane %v281, 1
    %v285 = vperm.slane %v281, 2
    %v286 = vperm.slane %v281, 3
    %v287 = vrot.slane %v284, 6
    %v288 = vrot.slane %v285, 4
    %v289 = vrot.slane %v286, 2
    %v290 = vsel %vm114, %v283, %v287
    %v291 = vsel %vm162, %v288, %v289
    %v292 = vsel %vm164, %v290, %v291
    %v294 = vadd.f32 %v280, %v292
    %v295 = vld [vmem:[#allocation10] sm:$0xf]
    %297 = vst [vmem:[#allocation1] ss:$4 sm:$0xff] %v294
    %v298 = vld.sshfl [vmem:[#allocation1] sm:$0xff pattern:$0x73625140]
    %v299 = vld.sshfl [vmem:[#allocation1 + $0x8] sm:$0xff pattern:$0x73625140]
    %v300 = vld.sshfl [vmem:[#allocation1 + $0x10] sm:$0xff pattern:$0x73625140]
    %v301 = vld.sshfl [vmem:[#allocation1 + $0x18] sm:$0xff pattern:$0x73625140]
    %v306 = vpack.c.bf16 %v298, %v298
    %v307 = vpack.c.bf16 %v299, %v299
    %v308 = vpack.c.bf16 %v300, %v300
    %v309 = vpack.c.bf16 %v301, %v301
    %v310 = vld [vmem:[#allocation8] sm:$0xff]
    %v311 = vld [vmem:[#allocation8 + $0x8] sm:$0xff]
    %v312 = vld [vmem:[#allocation8 + $0x10] sm:$0xff]
    %v313 = vld [vmem:[#allocation8 + $0x18] sm:$0xff]
    %v314 = vld [vmem:[#allocation8 + $0x20] sm:$0xff]
    %v315 = vld [vmem:[#allocation8 + $0x28] sm:$0xff]
    %v316 = vld [vmem:[#allocation8 + $0x30] sm:$0xff]
    %v317 = vld [vmem:[#allocation8 + $0x38] sm:$0xff]
    %v318 = vld [vmem:[#allocation8 + $0x40] sm:$0xff]
    %v319 = vld [vmem:[#allocation8 + $0x48] sm:$0xff]
    %v320 = vld [vmem:[#allocation8 + $0x50] sm:$0xff]
    %v321 = vld [vmem:[#allocation8 + $0x58] sm:$0xff]
    %v322 = vld [vmem:[#allocation8 + $0x60] sm:$0xff]
    %v323 = vld [vmem:[#allocation8 + $0x68] sm:$0xff]
    %v324 = vld [vmem:[#allocation8 + $0x70] sm:$0xff]
    %v325 = vld [vmem:[#allocation8 + $0x78] sm:$0xff]
    %v326 = vld [vmem:[#allocation8 + $0x80] sm:$0xff]
    %v327 = vld [vmem:[#allocation8 + $0x88] sm:$0xff]
    %v328 = vld [vmem:[#allocation8 + $0x90] sm:$0xff]
    %v329 = vld [vmem:[#allocation8 + $0x98] sm:$0xff]
    %v330 = vld [vmem:[#allocation8 + $0xa0] sm:$0xff]
    %v331 = vld [vmem:[#allocation8 + $0xa8] sm:$0xff]
    %v332 = vld [vmem:[#allocation8 + $0xb0] sm:$0xff]
    %v333 = vld [vmem:[#allocation8 + $0xb8] sm:$0xff]
    %v334 = vld [vmem:[#allocation8 + $0xc0] sm:$0xff]
    %v335 = vld [vmem:[#allocation8 + $0xc8] sm:$0xff]
    %v336 = vld [vmem:[#allocation8 + $0xd0] sm:$0xff]
    %v337 = vld [vmem:[#allocation8 + $0xd8] sm:$0xff]
    %v338 = vld [vmem:[#allocation8 + $0xe0] sm:$0xff]
    %v339 = vld [vmem:[#allocation8 + $0xe8] sm:$0xff]
    %v340 = vld [vmem:[#allocation8 + $0xf0] sm:$0xff]
    %v341 = vld [vmem:[#allocation8 + $0xf8] sm:$0xff]
    %v342 = vld [vmem:[#allocation8 + $0x100] sm:$0xff]
    %v343 = vld [vmem:[#allocation8 + $0x108] sm:$0xff]
    %v344 = vld [vmem:[#allocation8 + $0x110] sm:$0xff]
    %v345 = vld [vmem:[#allocation8 + $0x118] sm:$0xff]
    %v346 = vld [vmem:[#allocation8 + $0x120] sm:$0xff]
    %v347 = vld [vmem:[#allocation8 + $0x128] sm:$0xff]
    %v348 = vld [vmem:[#allocation8 + $0x130] sm:$0xff]
    %v349 = vld [vmem:[#allocation8 + $0x138] sm:$0xff]
    %v350 = vld [vmem:[#allocation8 + $0x140] sm:$0xff]
    %v351 = vld [vmem:[#allocation8 + $0x148] sm:$0xff]
    %v352 = vld [vmem:[#allocation8 + $0x150] sm:$0xff]
    %v353 = vld [vmem:[#allocation8 + $0x158] sm:$0xff]
    %v354 = vld [vmem:[#allocation8 + $0x160] sm:$0xff]
    %v355 = vld [vmem:[#allocation8 + $0x168] sm:$0xff]
    %v356 = vld [vmem:[#allocation8 + $0x170] sm:$0xff]
    %v357 = vld [vmem:[#allocation8 + $0x178] sm:$0xff]
    %v358 = vld [vmem:[#allocation8 + $0x180] sm:$0xff]
    %v359 = vld [vmem:[#allocation8 + $0x188] sm:$0xff]
    %v360 = vld [vmem:[#allocation8 + $0x190] sm:$0xff]
    %v361 = vld [vmem:[#allocation8 + $0x198] sm:$0xff]
    %v362 = vld [vmem:[#allocation8 + $0x1a0] sm:$0xff]
    %v363 = vld [vmem:[#allocation8 + $0x1a8] sm:$0xff]
    %v364 = vld [vmem:[#allocation8 + $0x1b0] sm:$0xff]
    %v365 = vld [vmem:[#allocation8 + $0x1b8] sm:$0xff]
    %v366 = vld [vmem:[#allocation8 + $0x1c0] sm:$0xff]
    %v367 = vld [vmem:[#allocation8 + $0x1c8] sm:$0xff]
    %v368 = vld [vmem:[#allocation8 + $0x1d0] sm:$0xff]
    %v369 = vld [vmem:[#allocation8 + $0x1d8] sm:$0xff]
    %v370 = vld [vmem:[#allocation8 + $0x1e0] sm:$0xff]
    %v371 = vld [vmem:[#allocation8 + $0x1e8] sm:$0xff]
    %v372 = vld [vmem:[#allocation8 + $0x1f0] sm:$0xff]
    %v373 = vld [vmem:[#allocation8 + $0x1f8] sm:$0xff]
    %v438 = vunpack.c.l.b16 %v310
    %v439 = vunpack.c.h.b16 %v310
    %v440 = vunpack.c.l.b16 %v311
    %v441 = vunpack.c.h.b16 %v311
    %v442 = vunpack.c.l.b16 %v312
    %v443 = vunpack.c.h.b16 %v312
    %v444 = vunpack.c.l.b16 %v313
    %v445 = vunpack.c.h.b16 %v313
    %v446 = vunpack.c.l.b16 %v314
    %v447 = vunpack.c.h.b16 %v314
    %v448 = vunpack.c.l.b16 %v315
    %v449 = vunpack.c.h.b16 %v315
    %v450 = vunpack.c.l.b16 %v316
    %v451 = vunpack.c.h.b16 %v316
    %v452 = vunpack.c.l.b16 %v317
    %v453 = vunpack.c.h.b16 %v317
    %v454 = vunpack.c.l.b16 %v318
    %v455 = vunpack.c.h.b16 %v318
    %v456 = vunpack.c.l.b16 %v319
    %v457 = vunpack.c.h.b16 %v319
    %v458 = vunpack.c.l.b16 %v320
    %v459 = vunpack.c.h.b16 %v320
    %v460 = vunpack.c.l.b16 %v321
    %v461 = vunpack.c.h.b16 %v321
    %v462 = vunpack.c.l.b16 %v322
    %v463 = vunpack.c.h.b16 %v322
    %v464 = vunpack.c.l.b16 %v323
    %v465 = vunpack.c.h.b16 %v323
    %v466 = vunpack.c.l.b16 %v324
    %v467 = vunpack.c.h.b16 %v324
    %v468 = vunpack.c.l.b16 %v325
    %v469 = vunpack.c.h.b16 %v325
    %v470 = vunpack.c.l.b16 %v326
    %v471 = vunpack.c.h.b16 %v326
    %v472 = vunpack.c.l.b16 %v327
    %v473 = vunpack.c.h.b16 %v327
    %v474 = vunpack.c.l.b16 %v328
    %v475 = vunpack.c.h.b16 %v328
    %v476 = vunpack.c.l.b16 %v329
    %v477 = vunpack.c.h.b16 %v329
    %v478 = vunpack.c.l.b16 %v330
    %v479 = vunpack.c.h.b16 %v330
    %v480 = vunpack.c.l.b16 %v331
    %v481 = vunpack.c.h.b16 %v331
    %v482 = vunpack.c.l.b16 %v332
    %v483 = vunpack.c.h.b16 %v332
    %v484 = vunpack.c.l.b16 %v333
    %v485 = vunpack.c.h.b16 %v333
    %v486 = vunpack.c.l.b16 %v334
    %v487 = vunpack.c.h.b16 %v334
    %v488 = vunpack.c.l.b16 %v335
    %v489 = vunpack.c.h.b16 %v335
    %v490 = vunpack.c.l.b16 %v336
    %v491 = vunpack.c.h.b16 %v336
    %v492 = vunpack.c.l.b16 %v337
    %v493 = vunpack.c.h.b16 %v337
    %v494 = vunpack.c.l.b16 %v338
    %v495 = vunpack.c.h.b16 %v338
    %v496 = vunpack.c.l.b16 %v339
    %v497 = vunpack.c.h.b16 %v339
    %v498 = vunpack.c.l.b16 %v340
    %v499 = vunpack.c.h.b16 %v340
    %v500 = vunpack.c.l.b16 %v341
    %v501 = vunpack.c.h.b16 %v341
    %v502 = vunpack.c.l.b16 %v342
    %v503 = vunpack.c.h.b16 %v342
    %v504 = vunpack.c.l.b16 %v343
    %v505 = vunpack.c.h.b16 %v343
    %v506 = vunpack.c.l.b16 %v344
    %v507 = vunpack.c.h.b16 %v344
    %v508 = vunpack.c.l.b16 %v345
    %v509 = vunpack.c.h.b16 %v345
    %v510 = vunpack.c.l.b16 %v346
    %v511 = vunpack.c.h.b16 %v346
    %v512 = vunpack.c.l.b16 %v347
    %v513 = vunpack.c.h.b16 %v347
    %v514 = vunpack.c.l.b16 %v348
    %v515 = vunpack.c.h.b16 %v348
    %v516 = vunpack.c.l.b16 %v349
    %v517 = vunpack.c.h.b16 %v349
    %v518 = vunpack.c.l.b16 %v350
    %v519 = vunpack.c.h.b16 %v350
    %v520 = vunpack.c.l.b16 %v351
    %v521 = vunpack.c.h.b16 %v351
    %v522 = vunpack.c.l.b16 %v352
    %v523 = vunpack.c.h.b16 %v352
    %v524 = vunpack.c.l.b16 %v353
    %v525 = vunpack.c.h.b16 %v353
    %v526 = vunpack.c.l.b16 %v354
    %v527 = vunpack.c.h.b16 %v354
    %v528 = vunpack.c.l.b16 %v355
    %v529 = vunpack.c.h.b16 %v355
    %v530 = vunpack.c.l.b16 %v356
    %v531 = vunpack.c.h.b16 %v356
    %v532 = vunpack.c.l.b16 %v357
    %v533 = vunpack.c.h.b16 %v357
    %v534 = vunpack.c.l.b16 %v358
    %v535 = vunpack.c.h.b16 %v358
    %v536 = vunpack.c.l.b16 %v359
    %v537 = vunpack.c.h.b16 %v359
    %v538 = vunpack.c.l.b16 %v360
    %v539 = vunpack.c.h.b16 %v360
    %v540 = vunpack.c.l.b16 %v361
    %v541 = vunpack.c.h.b16 %v361
    %v542 = vunpack.c.l.b16 %v362
    %v543 = vunpack.c.h.b16 %v362
    %v544 = vunpack.c.l.b16 %v363
    %v545 = vunpack.c.h.b16 %v363
    %v546 = vunpack.c.l.b16 %v364
    %v547 = vunpack.c.h.b16 %v364
    %v548 = vunpack.c.l.b16 %v365
    %v549 = vunpack.c.h.b16 %v365
    %v550 = vunpack.c.l.b16 %v366
    %v551 = vunpack.c.h.b16 %v366
    %v552 = vunpack.c.l.b16 %v367
    %v553 = vunpack.c.h.b16 %v367
    %v554 = vunpack.c.l.b16 %v368
    %v555 = vunpack.c.h.b16 %v368
    %v556 = vunpack.c.l.b16 %v369
    %v557 = vunpack.c.h.b16 %v369
    %v558 = vunpack.c.l.b16 %v370
    %v559 = vunpack.c.h.b16 %v370
    %v560 = vunpack.c.l.b16 %v371
    %v561 = vunpack.c.h.b16 %v371
    %v562 = vunpack.c.l.b16 %v372
    %v563 = vunpack.c.h.b16 %v372
    %v564 = vunpack.c.l.b16 %v373
    %v565 = vunpack.c.h.b16 %v373
    %v566 = vpack.c.b16 %v440, %v438
    %v567 = vpack.c.b16 %v441, %v439
    %v568 = vpack.c.b16 %v444, %v442
    %v569 = vpack.c.b16 %v445, %v443
    %v570 = vpack.c.b16 %v448, %v446
    %v571 = vpack.c.b16 %v449, %v447
    %v572 = vpack.c.b16 %v452, %v450
    %v573 = vpack.c.b16 %v453, %v451
    %v574 = vpack.c.b16 %v456, %v454
    %v575 = vpack.c.b16 %v457, %v455
    %v576 = vpack.c.b16 %v460, %v458
    %v577 = vpack.c.b16 %v461, %v459
    %v578 = vpack.c.b16 %v464, %v462
    %v579 = vpack.c.b16 %v465, %v463
    %v580 = vpack.c.b16 %v468, %v466
    %v581 = vpack.c.b16 %v469, %v467
    %v582 = vpack.c.b16 %v472, %v470
    %v583 = vpack.c.b16 %v473, %v471
    %v584 = vpack.c.b16 %v476, %v474
    %v585 = vpack.c.b16 %v477, %v475
    %v586 = vpack.c.b16 %v480, %v478
    %v587 = vpack.c.b16 %v481, %v479
    %v588 = vpack.c.b16 %v484, %v482
    %v589 = vpack.c.b16 %v485, %v483
    %v590 = vpack.c.b16 %v488, %v486
    %v591 = vpack.c.b16 %v489, %v487
    %v592 = vpack.c.b16 %v492, %v490
    %v593 = vpack.c.b16 %v493, %v491
    %v594 = vpack.c.b16 %v496, %v494
    %v595 = vpack.c.b16 %v497, %v495
    %v596 = vpack.c.b16 %v500, %v498
    %v597 = vpack.c.b16 %v501, %v499
    %v598 = vpack.c.b16 %v504, %v502
    %v599 = vpack.c.b16 %v505, %v503
    %v600 = vpack.c.b16 %v508, %v506
    %v601 = vpack.c.b16 %v509, %v507
    %v602 = vpack.c.b16 %v512, %v510
    %v603 = vpack.c.b16 %v513, %v511
    %v604 = vpack.c.b16 %v516, %v514
    %v605 = vpack.c.b16 %v517, %v515
    %v606 = vpack.c.b16 %v520, %v518
    %v607 = vpack.c.b16 %v521, %v519
    %v608 = vpack.c.b16 %v524, %v522
    %v609 = vpack.c.b16 %v525, %v523
    %v610 = vpack.c.b16 %v528, %v526
    %v611 = vpack.c.b16 %v529, %v527
    %v612 = vpack.c.b16 %v532, %v530
    %v613 = vpack.c.b16 %v533, %v531
    %v614 = vpack.c.b16 %v536, %v534
    %v615 = vpack.c.b16 %v537, %v535
    %v616 = vpack.c.b16 %v540, %v538
    %v617 = vpack.c.b16 %v541, %v539
    %v618 = vpack.c.b16 %v544, %v542
    %v619 = vpack.c.b16 %v545, %v543
    %v620 = vpack.c.b16 %v548, %v546
    %v621 = vpack.c.b16 %v549, %v547
    %v622 = vpack.c.b16 %v552, %v550
    %v623 = vpack.c.b16 %v553, %v551
    %v624 = vpack.c.b16 %v556, %v554
    %v625 = vpack.c.b16 %v557, %v555
    %v626 = vpack.c.b16 %v560, %v558
    %v627 = vpack.c.b16 %v561, %v559
    %v628 = vpack.c.b16 %v564, %v562
    %v629 = vpack.c.b16 %v565, %v563
    %694 = vmatpush.bf16.msra.mxu0 %v580
    %695 = vmatpush.bf16.msra.mxu0 %v578
    %696 = vmatpush.bf16.msra.mxu0 %v576
    %697 = vmatpush.bf16.msra.mxu0 %v574
    %698 = vmatpush.bf16.msra.mxu0 %v572
    %699 = vmatpush.bf16.msra.mxu0 %v570
    %700 = vmatpush.bf16.msra.mxu0 %v568
    %701 = vmatpush.bf16.msra.mxu0 %v566
    %702 = vmatmul.bf16.gmra.mxu0 %v306
    %v703 = vpop.f32.mrf.mxu0
    %v704 = vadd.f32 0.0, %v703
    %v705 = vpop.f32.mrf.mxu0
    %706 = vdwg.mxu0
    %707 = vmatpush.bf16.msra.mxu0 %v596
    %708 = vmatpush.bf16.msra.mxu0 %v594
    %709 = vmatpush.bf16.msra.mxu0 %v592
    %710 = vmatpush.bf16.msra.mxu0 %v590
    %711 = vmatpush.bf16.msra.mxu0 %v588
    %712 = vmatpush.bf16.msra.mxu0 %v586
    %713 = vmatpush.bf16.msra.mxu0 %v584
    %714 = vmatpush.bf16.msra.mxu0 %v582
    %715 = vmatmul.bf16.gmra.mxu0 %v307
    %v716 = vpop.f32.mrf.mxu0
    %v717 = vadd.f32 %v704, %v716
    %v718 = vpop.f32.mrf.mxu0
    %719 = vdwg.mxu0
    %720 = vmatpush.bf16.msra.mxu0 %v612
    %721 = vmatpush.bf16.msra.mxu0 %v610
    %722 = vmatpush.bf16.msra.mxu0 %v608
    %723 = vmatpush.bf16.msra.mxu0 %v606
    %724 = vmatpush.bf16.msra.mxu0 %v604
    %725 = vmatpush.bf16.msra.mxu0 %v602
    %726 = vmatpush.bf16.msra.mxu0 %v600
    %727 = vmatpush.bf16.msra.mxu0 %v598
    %728 = vmatmul.bf16.gmra.mxu0 %v308
    %v729 = vpop.f32.mrf.mxu0
    %v730 = vadd.f32 %v717, %v729
    %v731 = vpop.f32.mrf.mxu0
    %732 = vdwg.mxu0
    %733 = vmatpush.bf16.msra.mxu0 %v628
    %734 = vmatpush.bf16.msra.mxu0 %v626
    %735 = vmatpush.bf16.msra.mxu0 %v624
    %736 = vmatpush.bf16.msra.mxu0 %v622
    %737 = vmatpush.bf16.msra.mxu0 %v620
    %738 = vmatpush.bf16.msra.mxu0 %v618
    %739 = vmatpush.bf16.msra.mxu0 %v616
    %740 = vmatpush.bf16.msra.mxu0 %v614
    %741 = vmatmul.bf16.gmra.mxu0 %v309
    %v742 = vpop.f32.mrf.mxu0
    %v743 = vadd.f32 %v730, %v742
    %v744 = vpop.f32.mrf.mxu0
    %745 = vdwg.mxu0
    %746 = vmatpush.bf16.msra.mxu0 %v581
    %747 = vmatpush.bf16.msra.mxu0 %v579
    %748 = vmatpush.bf16.msra.mxu0 %v577
    %749 = vmatpush.bf16.msra.mxu0 %v575
    %750 = vmatpush.bf16.msra.mxu0 %v573
    %751 = vmatpush.bf16.msra.mxu0 %v571
    %752 = vmatpush.bf16.msra.mxu0 %v569
    %753 = vmatpush.bf16.msra.mxu0 %v567
    %754 = vmatmul.bf16.gmra.mxu0 %v306
    %v755 = vpop.f32.mrf.mxu0
    %v756 = vadd.f32 0.0, %v755
    %v757 = vpop.f32.mrf.mxu0
    %758 = vdwg.mxu0
    %759 = vmatpush.bf16.msra.mxu0 %v597
    %760 = vmatpush.bf16.msra.mxu0 %v595
    %761 = vmatpush.bf16.msra.mxu0 %v593
    %762 = vmatpush.bf16.msra.mxu0 %v591
    %763 = vmatpush.bf16.msra.mxu0 %v589
    %764 = vmatpush.bf16.msra.mxu0 %v587
    %765 = vmatpush.bf16.msra.mxu0 %v585
    %766 = vmatpush.bf16.msra.mxu0 %v583
    %767 = vmatmul.bf16.gmra.mxu0 %v307
    %v768 = vpop.f32.mrf.mxu0
    %v769 = vadd.f32 %v756, %v768
    %v770 = vpop.f32.mrf.mxu0
    %771 = vdwg.mxu0
    %772 = vmatpush.bf16.msra.mxu0 %v613
    %773 = vmatpush.bf16.msra.mxu0 %v611
    %774 = vmatpush.bf16.msra.mxu0 %v609
    %775 = vmatpush.bf16.msra.mxu0 %v607
    %776 = vmatpush.bf16.msra.mxu0 %v605
    %777 = vmatpush.bf16.msra.mxu0 %v603
    %778 = vmatpush.bf16.msra.mxu0 %v601
    %779 = vmatpush.bf16.msra.mxu0 %v599
    %780 = vmatmul.bf16.gmra.mxu0 %v308
    %v781 = vpop.f32.mrf.mxu0
    %v782 = vadd.f32 %v769, %v781
    %v783 = vpop.f32.mrf.mxu0
    %784 = vdwg.mxu0
    %785 = vmatpush.bf16.msra.mxu0 %v629
    %786 = vmatpush.bf16.msra.mxu0 %v627
    %787 = vmatpush.bf16.msra.mxu0 %v625
    %788 = vmatpush.bf16.msra.mxu0 %v623
    %789 = vmatpush.bf16.msra.mxu0 %v621
    %790 = vmatpush.bf16.msra.mxu0 %v619
    %791 = vmatpush.bf16.msra.mxu0 %v617
    %792 = vmatpush.bf16.msra.mxu0 %v615
    %793 = vmatmul.bf16.gmra.mxu0 %v309
    %v794 = vpop.f32.mrf.mxu0
    %v795 = vadd.f32 %v782, %v794
    %v796 = vpop.f32.mrf.mxu0
    %797 = vdwg.mxu0
    %v800 = vrot.slane %v795, 6
    %v801 = vsel %vm114, %v743, %v800
    %v803 = vadd.f32 %v295, %v801
    %804 = vst [vmem:[#allocation10] sm:$0xf] %v803
    // Predicated region
    $region38: #{tpu_custom_call.1} parent=1 // pred_check
      _
    $region39: #{tpu_custom_call.1} parent=1 // pred_check_branch
      %806 = sbr.rel (0) target = $region41
    $region40: #{tpu_custom_call.1} parent=1 // pred_region
      %808 = vsyncadd [#allocation4], 0
      %s810 = sshll.u32 [#allocation10], 4
      %s811 = int_to_ptr.vmem [resolvable:$true] %s810
      %s812 = sshll.u32 %s4, 4
      %s813 = int_to_ptr.hbm [resolvable:$true] %s812
      %815 = dma.vmem_to_hbm [thread:$0]  %s811, 64, %s813, [#allocation4]
    $region41: #{tpu_custom_call.1} parent=1 // pred_fallthru
      _
    // Predicated region
    $region42: #{tpu_custom_call.1} parent=1 // pred_check
      _
    $region43: #{tpu_custom_call.1} parent=1 // pred_check_branch
      %817 = sbr.rel (0) target = $region45
    $region44: #{tpu_custom_call.1} parent=1 // pred_region
      %819 = dma.done [#allocation4], 64
    $region45: #{tpu_custom_call.1} parent=1 // pred_fallthru
      _
    %820 = vsyncpa [#allocation3], 1
    %821 = vsyncpa [#allocation6], 1
    %822 = vsyncpa [#allocation9], 1
    %823 = vsyncpa [#allocation4], 1

</llo_original>
